<compile_context>
chip_gen: v6e
topology: v6e:2x2x1
jax: 0.10.0
libtpu: 0.0.40
codegen_flags: <defaults>
</compile_context>

<pallas_src>
import functools

import jax
import jax.numpy as jnp
from jax.experimental import pallas as pl
from jax.experimental.pallas import tpu as pltpu


def _round_up(n: int, m: int) -> int:
    return ((n + m - 1) // m) * m


def _cdiv(a: int, b: int) -> int:
    return (a + b - 1) // b


def _vmem_capacity_bytes() -> int:
    try:
        return int(pltpu.get_tpu_info().vmem_capacity_bytes)
    except Exception:
        return 64 * 1024 * 1024  # conservative fallback (fits every generation)


def _ae_kernel(x_ref, w_enc_ref, b_enc_ref, w_dec_ref, b_dec_ref, out_ref):
    """One batch tile: out = (x @ W_enc + b_enc) @ W_dec + b_dec.

    Weights may be bf16 (MXU inputs); accumulation and bias adds are f32.
    """
    cdt = w_enc_ref.dtype
    x = x_ref[...].astype(cdt)
    # Encoder: [TB, In] @ [In, H] + [1, H]  (f32 accumulate on MXU)
    h = jnp.dot(x, w_enc_ref[...], preferred_element_type=jnp.float32)
    h = h + b_enc_ref[...]
    # Decoder: [TB, H] @ [H, In] + [1, In]
    z = jnp.dot(h.astype(cdt), w_dec_ref[...], preferred_element_type=jnp.float32)
    z = z + b_dec_ref[...]
    out_ref[...] = z.astype(out_ref.dtype)


def ae_forward(x, w_enc, b_enc, w_dec, b_dec, *,
               block_batch: int = 512,
               compute_dtype=jnp.float32):
    """AE forward pass.

    x:     [B, In]  activations (f32 or bf16 -- used as given, no wrapper cast)
    w_enc: [In, H]  (pre-transposed vs PyTorch's [out, in])
    b_enc: [1, H]
    w_dec: [H, In]
    b_dec: [1, In]
    """
    B, In = x.shape
    H = w_enc.shape[1]
    assert w_enc.shape == (In, H)
    assert b_enc.shape == (1, H)
    assert w_dec.shape == (H, In)
    assert b_dec.shape == (1, In)

    wbytes = jnp.dtype(compute_dtype).itemsize
    xbytes = jnp.dtype(x.dtype).itemsize

    # ---------------- Batch tile selection (divisor-aware, VMEM-aware) --------
    B8 = _round_up(B, 8)
    block_batch = max(8, _round_up(block_batch, 8))
    if B8 <= block_batch:
        TB = B8                                   # tiny/one-tile fast path, grid=(1,)
    else:
        gb = _cdiv(B8, block_batch)
        TB = _round_up(_cdiv(B8, gb), 8)          # minimize batch-padding waste

    vmem_cap = _vmem_capacity_bytes()
    vmem_budget = int(0.80 * vmem_cap)

    def vmem_est(tb: int) -> int:
        weights = wbytes * (In * H) * 2 * 1       # Buffered(1): one copy each
        biases = 4 * (H + In)                     # Buffered(1)
        x_bufs = xbytes * 2 * tb * In             # streamed input, double-buffered
        o_bufs = 4 * 2 * tb * In                  # streamed output, double-buffered
        hidden = 4 * tb * H                       # in-body f32 activation
        return weights + biases + x_bufs + o_bufs + hidden

    while vmem_est(TB) > vmem_budget and TB > 8:
        TB = max(8, _round_up(TB // 2, 8))

    grid_b = _cdiv(B8, TB)
    B_p = grid_b * TB

    # Only pad the batch (sublane) dim, and only when actually needed.
    x_p = x if B_p == B else jnp.pad(x, ((0, B_p - B), (0, 0)))
    w_enc_c = w_enc.astype(compute_dtype)
    w_dec_c = w_dec.astype(compute_dtype)
    b_enc_c = b_enc.astype(jnp.float32)
    b_dec_c = b_dec.astype(jnp.float32)

    vmem_limit = min(int(0.85 * vmem_cap),
                     max(32 * 1024 * 1024, int(vmem_est(TB) * 2)))

    cost = pl.CostEstimate(
        flops=4 * B_p * In * H,                   # two matmuls @ 2*M*K*N each
        transcendentals=0,
        bytes_accessed=(xbytes * B_p * In         # x read
                        + 4 * B_p * In            # out write
                        + wbytes * 2 * In * H     # both weights, read once
                        + 4 * (In + H)),          # biases
    )

    # Weight/bias blocks: constant index_map + single-buffered (VMEM-resident).
    resident = functools.partial(pl.BlockSpec, pipeline_mode=pl.Buffered(1))

    out_p = pl.pallas_call(
        _ae_kernel,
        out_shape=jax.ShapeDtypeStruct((B_p, In), jnp.float32),
        grid=(grid_b,),
        in_specs=[
            pl.BlockSpec((TB, In), lambda i: (i, 0)),     # x: streamed over batch
            resident((In, H), lambda i: (0, 0)),          # W_enc
            resident((1, H), lambda i: (0, 0)),           # b_enc
            resident((H, In), lambda i: (0, 0)),          # W_dec
            resident((1, In), lambda i: (0, 0)),          # b_dec
        ],
        out_specs=pl.BlockSpec((TB, In), lambda i: (i, 0)),
        compiler_params=pltpu.CompilerParams(
            dimension_semantics=("parallel",),            # batch over TCs on v7x
            vmem_limit_bytes=vmem_limit,
        ),
        cost_estimate=cost,
    )(x_p, w_enc_c, b_enc_c, w_dec_c, b_dec_c)

    return out_p if B_p == B else out_p[:B]


def init_ae_params(key, input_shape, hidden_shape):
    """Deterministic init mimicking torch.nn.Linear's U(-1/sqrt(fan_in), 1/sqrt(fan_in))."""
    k1, k2, k3, k4 = jax.random.split(key, 4)
    bound_enc = 1.0 / jnp.sqrt(input_shape)
    bound_dec = 1.0 / jnp.sqrt(hidden_shape)
    # Stored as [in, out] (transpose of PyTorch's [out, in]) for `x @ W`.
    w_enc = jax.random.uniform(k1, (input_shape, hidden_shape), jnp.float32,
                               -bound_enc, bound_enc)
    b_enc = jax.random.uniform(k2, (1, hidden_shape), jnp.float32,
                               -bound_enc, bound_enc)
    w_dec = jax.random.uniform(k3, (hidden_shape, input_shape), jnp.float32,
                               -bound_dec, bound_dec)
    b_dec = jax.random.uniform(k4, (1, input_shape), jnp.float32,
                               -bound_dec, bound_dec)
    return w_enc, b_enc, w_dec, b_dec


def _reference(x, w_enc, b_enc, w_dec, b_dec):
    return (x @ w_enc + b_enc) @ w_dec + b_dec


if __name__ == "__main__":
    INPUT_SHAPE = 16   # feature dimension of the AE
    HIDDEN_SHAPE = 32  # latent dimension
    BATCH = 8

    key = jax.random.PRNGKey(0)
    kx, kp, kx2 = jax.random.split(key, 3)

    w_enc, b_enc, w_dec, b_dec = init_ae_params(kp, INPUT_SHAPE, HIDDEN_SHAPE)

    fwd = jax.jit(functools.partial(ae_forward, block_batch=512))

    # --- Small case (matches the module's typical toy-maze usage): grid=(1,), no padding. ---
    x = jax.random.normal(kx, (BATCH, INPUT_SHAPE), jnp.float32)
    decoded = jax.block_until_ready(fwd(x, w_enc, b_enc, w_dec, b_dec))
    ref = _reference(x, w_enc, b_enc, w_dec, b_dec)
    assert decoded.shape == (BATCH, INPUT_SHAPE)
    assert jnp.allclose(decoded, ref, atol=1e-5, rtol=1e-5)

    # --- Larger batch: exercises the multi-step batch grid (TB=304, grid=(2,)). ---
    x2 = jax.random.normal(kx2, (600, INPUT_SHAPE), jnp.float32)
    decoded2 = jax.block_until_ready(fwd(x2, w_enc, b_enc, w_dec, b_dec))
    ref2 = _reference(x2, w_enc, b_enc, w_dec, b_dec)
    assert decoded2.shape == (600, INPUT_SHAPE)
    assert jnp.allclose(decoded2, ref2, atol=1e-5, rtol=1e-5)

    print("KERNEL_OK")
</pallas_src>

<mosaic_0001>
module attributes {stable_mosaic.version = 11 : i64} {
  func.func @_ae_kernel(%arg0: i32, %arg1: memref<8x16xf32, #tpu.memory_space<vmem>>, %arg2: memref<16x32xf32, #tpu.memory_space<vmem>>, %arg3: memref<1x32xf32, #tpu.memory_space<vmem>>, %arg4: memref<32x16xf32, #tpu.memory_space<vmem>>, %arg5: memref<1x16xf32, #tpu.memory_space<vmem>>, %arg6: memref<8x16xf32, #tpu.memory_space<vmem>>) attributes {dimension_semantics = [#tpu.dimension_semantics<parallel>], iteration_bounds = array<i64: 1>, scalar_prefetch = 0 : i64, scratch_operands = 0 : i64, tpu.core_type = #tpu.core_type<tc>, window_params = [{transform_indices = @transform_0, window_bounds = array<i64: 8, 16>}, {pipeline_mode = #tpu.pipeline_mode<synchronous>, transform_indices = @transform_1, window_bounds = array<i64: 16, 32>}, {pipeline_mode = #tpu.pipeline_mode<synchronous>, transform_indices = @transform_2, window_bounds = array<i64: 1, 32>}, {pipeline_mode = #tpu.pipeline_mode<synchronous>, transform_indices = @transform_3, window_bounds = array<i64: 32, 16>}, {pipeline_mode = #tpu.pipeline_mode<synchronous>, transform_indices = @transform_4, window_bounds = array<i64: 1, 16>}, {transform_indices = @transform_5, window_bounds = array<i64: 8, 16>}]} {
    %c0 = arith.constant 0 : index
    %c0_0 = arith.constant 0 : index
    %0 = vector.load %arg1[%c0, %c0_0] : memref<8x16xf32, #tpu.memory_space<vmem>>, vector<8x16xf32>
    %c0_1 = arith.constant 0 : index
    %c0_2 = arith.constant 0 : index
    %1 = vector.load %arg2[%c0_1, %c0_2] : memref<16x32xf32, #tpu.memory_space<vmem>>, vector<16x32xf32>
    %cst = arith.constant dense<0.000000e+00> : vector<8x32xf32>
    %2 = tpu.matmul %0, %1, %cst {dimension_numbers = #tpu.dot_dimension_numbers<[1], [0], [0], [1], [0, 0, 1, 1], [], []>} : vector<8x16xf32>, vector<16x32xf32>, vector<8x32xf32> -> vector<8x32xf32>
    %c0_3 = arith.constant 0 : index
    %c0_4 = arith.constant 0 : index
    %3 = vector.load %arg3[%c0_3, %c0_4] : memref<1x32xf32, #tpu.memory_space<vmem>>, vector<1x32xf32>
    %4 = vector.broadcast %3 : vector<1x32xf32> to vector<8x32xf32>
    %5 = arith.addf %2, %4 : vector<8x32xf32>
    %c0_5 = arith.constant 0 : index
    %c0_6 = arith.constant 0 : index
    %6 = vector.load %arg4[%c0_5, %c0_6] : memref<32x16xf32, #tpu.memory_space<vmem>>, vector<32x16xf32>
    %cst_7 = arith.constant dense<0.000000e+00> : vector<8x16xf32>
    %7 = tpu.matmul %5, %6, %cst_7 {dimension_numbers = #tpu.dot_dimension_numbers<[1], [0], [0], [1], [0, 0, 1, 1], [], []>} : vector<8x32xf32>, vector<32x16xf32>, vector<8x16xf32> -> vector<8x16xf32>
    %c0_8 = arith.constant 0 : index
    %c0_9 = arith.constant 0 : index
    %8 = vector.load %arg5[%c0_8, %c0_9] : memref<1x16xf32, #tpu.memory_space<vmem>>, vector<1x16xf32>
    %9 = vector.broadcast %8 : vector<1x16xf32> to vector<8x16xf32>
    %10 = arith.addf %7, %9 : vector<8x16xf32>
    %c0_10 = arith.constant 0 : index
    %c0_11 = arith.constant 0 : index
    %11 = vector.load %arg6[%c0_10, %c0_11] : memref<8x16xf32, #tpu.memory_space<vmem>>, vector<8x16xf32>
    tpu.vector_store %arg6[%c0_10, %c0_11], %10 {strides = array<i32>} : memref<8x16xf32, #tpu.memory_space<vmem>>, vector<8x16xf32>,
    return
  }
  func.func @transform_0(%arg0: i32) -> (i32, i32) {
    %c0_i32 = arith.constant 0 : i32
    %c0_i32_0 = arith.constant 0 : i32
    return %arg0, %c0_i32 : i32, i32
  }
  func.func @transform_1(%arg0: i32) -> (i32, i32) {
    %c0_i32 = arith.constant 0 : i32
    %c0_i32_0 = arith.constant 0 : i32
    %c0_i32_1 = arith.constant 0 : i32
    return %c0_i32, %c0_i32_0 : i32, i32
  }
  func.func @transform_2(%arg0: i32) -> (i32, i32) {
    %c0_i32 = arith.constant 0 : i32
    %c0_i32_0 = arith.constant 0 : i32
    %c0_i32_1 = arith.constant 0 : i32
    return %c0_i32, %c0_i32_0 : i32, i32
  }
  func.func @transform_3(%arg0: i32) -> (i32, i32) {
    %c0_i32 = arith.constant 0 : i32
    %c0_i32_0 = arith.constant 0 : i32
    %c0_i32_1 = arith.constant 0 : i32
    return %c0_i32, %c0_i32_0 : i32, i32
  }
  func.func @transform_4(%arg0: i32) -> (i32, i32) {
    %c0_i32 = arith.constant 0 : i32
    %c0_i32_0 = arith.constant 0 : i32
    %c0_i32_1 = arith.constant 0 : i32
    return %c0_i32, %c0_i32_0 : i32, i32
  }
  func.func @transform_5(%arg0: i32) -> (i32, i32) {
    %c0_i32 = arith.constant 0 : i32
    %c0_i32_0 = arith.constant 0 : i32
    return %arg0, %c0_i32 : i32, i32
  }
}

</mosaic_0001>

<llo_original>
// kernel: ae_forward.1
$region0: #{ae_forward.1}
  #allocation0 [shape = 'u32[]', space=smem, size = 0x4, offset = 0x4, fixed_abs, tag = 'smem constant byte address 0x4 - core index']
  #allocation1 [shape = 'u32[144,128]{1,0:T(1,128)}', space=vmem, size = 0x12000, scoped, tag = 'internal scratch']
  %s0 = inlined_call_operand.vmem [shape: f32[8,16], index: 0, kind: input, shape index: {}]
  %s1 = inlined_call_operand.vmem [shape: f32[16,32], index: 1, kind: input, shape index: {}]
  %s2 = inlined_call_operand.vmem [shape: f32[1,32], index: 2, kind: input, shape index: {}]
  %s3 = inlined_call_operand.vmem [shape: f32[32,16], index: 3, kind: input, shape index: {}]
  %s4 = inlined_call_operand.vmem [shape: f32[1,16], index: 4, kind: input, shape index: {}]
  %s5 = inlined_call_operand.hbm [shape: f32[8,16], index: 5, kind: output, shape index: {}]
  %s6 = sld [smem:[#allocation0]]
  $region30: #{ae_forward.1} parent=0
    _
  %s8 = ssub.s32 1, %s6
  %s9 = scalar_select 0, %s8, %s6
  $region1: #{ae_forward.1} parent=0
    #allocation2 [shape = 'u8[4096]{0}', space=vmem, size = 0x1000, scoped, tag = 'output window, operand 0, single buffered']
    #allocation3 [shape = 's32[1]{0}', space=sflag, size = 0x4, scoped, tag = 'scoped memory for ae_forward.1']
    %10 = vsyncpa [#allocation3], 0
    // Predicated region
    $region2: #{ae_forward.1} parent=1 // pred_check
      _
    $region3: #{ae_forward.1} parent=1 // pred_check_branch
      %12 = sbr.rel (0) target = $region5
    $region4: #{ae_forward.1} parent=1 // pred_region
      _
    $region5: #{ae_forward.1} parent=1 // pred_fallthru
      _
    // Predicated region
    $region6: #{ae_forward.1} parent=1 // pred_check
      _
    $region7: #{ae_forward.1} parent=1 // pred_check_branch
      %14 = sbr.rel (0) target = $region9
    $region8: #{ae_forward.1} parent=1 // pred_region
      _
    $region9: #{ae_forward.1} parent=1 // pred_fallthru
      _
    // Predicated region
    $region10: #{ae_forward.1} parent=1 // pred_check
      _
    $region11: #{ae_forward.1} parent=1 // pred_check_branch
      %16 = sbr.rel (0) target = $region13
    $region12: #{ae_forward.1} parent=1 // pred_region
      _
    $region13: #{ae_forward.1} parent=1 // pred_fallthru
      _
    // Predicated region
    $region14: #{ae_forward.1} parent=1 // pred_check
      _
    $region15: #{ae_forward.1} parent=1 // pred_check_branch
      %18 = sbr.rel (0) target = $region17
    $region16: #{ae_forward.1} parent=1 // pred_region
      _
    $region17: #{ae_forward.1} parent=1 // pred_fallthru
      _
    // Predicated region
    $region18: #{ae_forward.1} parent=1 // pred_check
      _
    $region19: #{ae_forward.1} parent=1 // pred_check_branch
      %20 = sbr.rel (0) target = $region21
    $region20: #{ae_forward.1} parent=1 // pred_region
      _
    $region21: #{ae_forward.1} parent=1 // pred_fallthru
      _
    %v21 = vld [vmem:[%s0] sm:$0xff]
    %v22 = vld [vmem:[%s1] sm:$0xff]
    %v23 = vld [vmem:[%s1 + $0x8] sm:$0xff]
    %v24 = vld [vmem:[%s2] sm:$0x1]
    %v26 = vlaneseq
    %v27 = vshrl.u32 %v26, 7
    %v28 = vsub.s32 0, %v27
    %v29 = vrot.slane %v24, %v28
    %vm31 = vcmask 130048
    %v33 = vsel %vm31, %v21, 0
    %35 = vmatprep.subr.mxu0 0.0
    %36 = vmatpush1.msra.mxu0 0.0
    %37 = vmatprep.subr.mxu0 0.0
    %38 = vmatpush1.msra.mxu0 0.0
    %39 = vmatprep.subr.mxu0 0.0
    %40 = vmatpush1.msra.mxu0 0.0
    %41 = vmatprep.subr.mxu0 0.0
    %42 = vmatpush1.msra.mxu0 0.0
    %43 = vmatprep.subr.mxu0 0.0
    %44 = vmatpush1.msra.mxu0 0.0
    %45 = vmatprep.subr.mxu0 0.0
    %46 = vmatpush1.msra.mxu0 0.0
    %47 = vmatprep.subr.mxu0 0.0
    %48 = vmatpush1.msra.mxu0 0.0
    %49 = vmatprep.subr.mxu0 0.0
    %50 = vmatpush1.msra.mxu0 0.0
    %51 = vmatprep.subr.mxu0 0.0
    %52 = vmatpush1.msra.mxu0 0.0
    %53 = vmatprep.subr.mxu0 0.0
    %54 = vmatpush1.msra.mxu0 0.0
    %55 = vmatprep.subr.mxu0 0.0
    %56 = vmatpush1.msra.mxu0 0.0
    %57 = vmatprep.subr.mxu0 0.0
    %58 = vmatpush1.msra.mxu0 0.0
    %59 = vmatprep.subr.mxu0 0.0
    %60 = vmatpush1.msra.mxu0 0.0
    %61 = vmatprep.subr.mxu0 0.0
    %62 = vmatpush1.msra.mxu0 0.0
    %63 = vmatprep.subr.mxu0 0.0
    %64 = vmatpush1.msra.mxu0 %v23
    %65 = vmatprep.subr.mxu0 0.0
    %66 = vmatpush1.msra.mxu0 %v22
    %67 = vmatprep.subr.mxu0 0.0
    %68 = vmatpush2.msra.mxu0 0.0
    %69 = vmatprep.subr.mxu0 0.0
    %70 = vmatpush2.msra.mxu0 0.0
    %71 = vmatprep.subr.mxu0 0.0
    %72 = vmatpush2.msra.mxu0 0.0
    %73 = vmatprep.subr.mxu0 0.0
    %74 = vmatpush2.msra.mxu0 0.0
    %75 = vmatprep.subr.mxu0 0.0
    %76 = vmatpush2.msra.mxu0 0.0
    %77 = vmatprep.subr.mxu0 0.0
    %78 = vmatpush2.msra.mxu0 0.0
    %79 = vmatprep.subr.mxu0 0.0
    %80 = vmatpush2.msra.mxu0 0.0
    %81 = vmatprep.subr.mxu0 0.0
    %82 = vmatpush2.msra.mxu0 0.0
    %83 = vmatprep.subr.mxu0 0.0
    %84 = vmatpush2.msra.mxu0 0.0
    %85 = vmatprep.subr.mxu0 0.0
    %86 = vmatpush2.msra.mxu0 0.0
    %87 = vmatprep.subr.mxu0 0.0
    %88 = vmatpush2.msra.mxu0 0.0
    %89 = vmatprep.subr.mxu0 0.0
    %90 = vmatpush2.msra.mxu0 0.0
    %91 = vmatprep.subr.mxu0 0.0
    %92 = vmatpush2.msra.mxu0 0.0
    %93 = vmatprep.subr.mxu0 0.0
    %94 = vmatpush2.msra.mxu0 0.0
    %95 = vmatprep.subr.mxu0 0.0
    %96 = vmatpush2.msra.mxu0 0.0
    %97 = vmatprep.subr.mxu0 0.0
    %98 = vmatpush2.msra.mxu0 0.0
    %99 = vmatprep.mubr.f32.mxu0 0.0
    %100 = vmatmul.mubr.f32.gmra.mxu0 %v33
    %v101 = vpop.f32.mrf.mxu0
    %v102 = vadd.f32 %v29, %v101
    %v103 = vpop.f32.mrf.mxu0
    %104 = vdwg.mxu0
    %v105 = vld [vmem:[%s3] sm:$0xff]
    %v106 = vld [vmem:[%s3 + $0x8] sm:$0xff]
    %v107 = vld [vmem:[%s3 + $0x10] sm:$0xff]
    %v108 = vld [vmem:[%s3 + $0x18] sm:$0xff]
    %v109 = vld [vmem:[%s4] sm:$0x1]
    %v111 = vlaneseq
    %v112 = vshrl.u32 %v111, 7
    %v113 = vsub.s32 0, %v112
    %v114 = vrot.slane %v109, %v113
    %vm116 = vcmask 261120
    %v118 = vsel %vm116, %v102, 0
    %120 = vmatprep.subr.mxu0 0.0
    %121 = vmatpush1.msra.mxu0 0.0
    %122 = vmatprep.subr.mxu0 0.0
    %123 = vmatpush1.msra.mxu0 0.0
    %124 = vmatprep.subr.mxu0 0.0
    %125 = vmatpush1.msra.mxu0 0.0
    %126 = vmatprep.subr.mxu0 0.0
    %127 = vmatpush1.msra.mxu0 0.0
    %128 = vmatprep.subr.mxu0 0.0
    %129 = vmatpush1.msra.mxu0 0.0
    %130 = vmatprep.subr.mxu0 0.0
    %131 = vmatpush1.msra.mxu0 0.0
    %132 = vmatprep.subr.mxu0 0.0
    %133 = vmatpush1.msra.mxu0 0.0
    %134 = vmatprep.subr.mxu0 0.0
    %135 = vmatpush1.msra.mxu0 0.0
    %136 = vmatprep.subr.mxu0 0.0
    %137 = vmatpush1.msra.mxu0 0.0
    %138 = vmatprep.subr.mxu0 0.0
    %139 = vmatpush1.msra.mxu0 0.0
    %140 = vmatprep.subr.mxu0 0.0
    %141 = vmatpush1.msra.mxu0 0.0
    %142 = vmatprep.subr.mxu0 0.0
    %143 = vmatpush1.msra.mxu0 0.0
    %144 = vmatprep.subr.mxu0 0.0
    %145 = vmatpush1.msra.mxu0 %v108
    %146 = vmatprep.subr.mxu0 0.0
    %147 = vmatpush1.msra.mxu0 %v107
    %148 = vmatprep.subr.mxu0 0.0
    %149 = vmatpush1.msra.mxu0 %v106
    %150 = vmatprep.subr.mxu0 0.0
    %151 = vmatpush1.msra.mxu0 %v105
    %152 = vmatprep.subr.mxu0 0.0
    %153 = vmatpush2.msra.mxu0 0.0
    %154 = vmatprep.subr.mxu0 0.0
    %155 = vmatpush2.msra.mxu0 0.0
    %156 = vmatprep.subr.mxu0 0.0
    %157 = vmatpush2.msra.mxu0 0.0
    %158 = vmatprep.subr.mxu0 0.0
    %159 = vmatpush2.msra.mxu0 0.0
    %160 = vmatprep.subr.mxu0 0.0
    %161 = vmatpush2.msra.mxu0 0.0
    %162 = vmatprep.subr.mxu0 0.0
    %163 = vmatpush2.msra.mxu0 0.0
    %164 = vmatprep.subr.mxu0 0.0
    %165 = vmatpush2.msra.mxu0 0.0
    %166 = vmatprep.subr.mxu0 0.0
    %167 = vmatpush2.msra.mxu0 0.0
    %168 = vmatprep.subr.mxu0 0.0
    %169 = vmatpush2.msra.mxu0 0.0
    %170 = vmatprep.subr.mxu0 0.0
    %171 = vmatpush2.msra.mxu0 0.0
    %172 = vmatprep.subr.mxu0 0.0
    %173 = vmatpush2.msra.mxu0 0.0
    %174 = vmatprep.subr.mxu0 0.0
    %175 = vmatpush2.msra.mxu0 0.0
    %176 = vmatprep.subr.mxu0 0.0
    %177 = vmatpush2.msra.mxu0 0.0
    %178 = vmatprep.subr.mxu0 0.0
    %179 = vmatpush2.msra.mxu0 0.0
    %180 = vmatprep.subr.mxu0 0.0
    %181 = vmatpush2.msra.mxu0 0.0
    %182 = vmatprep.subr.mxu0 0.0
    %183 = vmatpush2.msra.mxu0 0.0
    %184 = vmatprep.mubr.f32.mxu0 0.0
    %185 = vmatmul.mubr.f32.gmra.mxu0 %v118
    %v186 = vpop.f32.mrf.mxu0
    %v187 = vadd.f32 %v114, %v186
    %v188 = vpop.f32.mrf.mxu0
    %189 = vdwg.mxu0
    %190 = vst.msk [vmem:[#allocation2] sm:$0xff] %vm31, %v187
    // Predicated region
    $region22: #{ae_forward.1} parent=1 // pred_check
      _
    $region23: #{ae_forward.1} parent=1 // pred_check_branch
      %192 = sbr.rel (0) target = $region25
    $region24: #{ae_forward.1} parent=1 // pred_region
      %s194 = ssub.s32 128, 128
      %195 = vsyncadd [#allocation3], %s194
      %s197 = sshll.u32 [#allocation2], 4
      %s198 = int_to_ptr.vmem [resolvable:$true] %s197
      %200 = dma.vmem_to_hbm [thread:$0]  %s198, 128, %s5, [#allocation3]
    $region25: #{ae_forward.1} parent=1 // pred_fallthru
      _
    // Predicated region
    $region26: #{ae_forward.1} parent=1 // pred_check
      _
    $region27: #{ae_forward.1} parent=1 // pred_check_branch
      %202 = sbr.rel (0) target = $region29
    $region28: #{ae_forward.1} parent=1 // pred_region
      %203 = dma.done [#allocation3], 128
    $region29: #{ae_forward.1} parent=1 // pred_fallthru
      _
    %204 = vsyncpa [#allocation3], 1

</llo_original>
